<compile_context>
chip_gen: v7x
topology: tpu7x:2x2x1
jax: 0.10.0
libtpu: 0.0.40
codegen_flags: <defaults>
</compile_context>

<pallas_src>
import functools
import math

import jax
import jax.numpy as jnp
from jax import lax
from jax.experimental import pallas as pl
from jax.experimental.pallas import tpu as pltpu


def _level_geometry(H, W, num_levels):
    """Per-level (kh, kw, ph, pw, oh, ow) exactly as the PyTorch module computes them."""
    geoms = []
    for i in range(num_levels):
        level = i + 1
        kh = math.ceil(H / level)
        kw = math.ceil(W / level)
        ph = (kh * level - H + 1) // 2
        pw = (kw * level - W + 1) // 2
        oh = (H + 2 * ph - kh) // kh + 1
        ow = (W + 2 * pw - kw) // kw + 1
        geoms.append((kh, kw, ph, pw, oh, ow))
    return geoms


def _spp_kernel(x_ref, o_ref, *, geoms, pool_type, height, width, feat_pad):
    # x_ref: (Nb, C, H*W) lane-dense VMEM block.
    # o_ref: (Nb, C, feat_pad) lane-dense VMEM block, feat_pad % 128 == 0.
    H, W = height, width
    is_max = pool_type == "max_pool"

    # One upfront cast to f32 (no-op for f32 inputs; avoids per-op bf16
    # conversions on v5e's f32-only VPU). Max results cast back exactly.
    x = x_ref[...].astype(jnp.float32)
    Nb, C, _ = x.shape

    pieces = []
    nfeat = 0
    for (kh, kw, ph, pw, oh, ow) in geoms:
        inv = 1.0 / float(kh * kw)   # count_include_pad=True divisor
        for i in range(oh):
            h0 = max(i * kh - ph, 0)
            h1 = min(i * kh - ph + kh, H)
            # H-pooling on the flat lane axis: row h of this window is the
            # contiguous lane segment [h*W, (h+1)*W). Pure VPU elementwise
            # max/add — no XLU reduction, no 4-D relayout.
            band = x[:, :, h0 * W:h0 * W + W]
            for h in range(h0 + 1, h1):
                seg = x[:, :, h * W:h * W + W]
                band = jnp.maximum(band, seg) if is_max else band + seg
            # W-pooling: one narrow lane-reduce per output cell.
            for j in range(ow):
                w0 = max(j * kw - pw, 0)
                w1 = min(j * kw - pw + kw, W)
                win = band[:, :, w0:w1]
                if is_max:
                    # Window clipping == -inf padding for max pool.
                    cell = jnp.max(win, axis=-1, keepdims=True)
                else:
                    # Zero padding contributes 0 to the sum; divide by kh*kw.
                    cell = jnp.sum(win, axis=-1, keepdims=True) * inv
                pieces.append(cell)          # (Nb, C, 1), (i, j)-ordered per level
        nfeat += oh * ow

    if feat_pad > nfeat:
        pieces.append(jnp.zeros((Nb, C, feat_pad - nfeat), jnp.float32))

    # Single lane-dense assembly + single unmasked store (one output DMA).
    assembled = pieces[0] if len(pieces) == 1 else jnp.concatenate(pieces, axis=-1)
    o_ref[...] = assembled.astype(o_ref.dtype)


def _vmem_budget():
    """Per-generation VMEM plan: (double-buffer budget, mosaic vmem limit)."""
    try:
        cap = int(pltpu.get_tpu_info().vmem_capacity_bytes)
    except Exception:
        cap = 64 * 1024 * 1024          # assume the smallest (v7x: 64 MiB/TC)
    budget = cap // 3                    # working set (double-buffered in/out)
    limit = min((cap * 3) // 4, 96 * 1024 * 1024)   # <=48 MiB on v7x, <=96 MiB on v5e/v6e
    return budget, limit


def _pick_batch_block(N, C, hw, feat_pad, dtype):
    """Largest batch block fitting the VMEM budget; guarantees >=2 grid steps when N>=2."""
    itemsize = jnp.dtype(dtype).itemsize
    sub = 8 * max(4 // itemsize, 1)      # dtype-aware sublane rounding: 8/16/32

    def rup(v, m):
        return (v + m - 1) // m * m

    in_bytes = rup(C, sub) * rup(hw, 128) * itemsize
    out_bytes = rup(C, sub) * rup(feat_pad, 128) * itemsize
    per_elem = in_bytes + out_bytes

    budget, limit = _vmem_budget()
    nb = max(1, min(N, budget // max(2 * per_elem, 1)))   # x2: double-buffered
    if N >= 2:
        # Keep the grid >= 2 so the "parallel" axis can shard across both
        # TensorCores on v7x (one extra ~0.35us step; free on v5e/v6e).
        nb = min(nb, -(-N // 2))
    return nb, limit


def spp_layer(x, num_levels, pool_type="max_pool"):
    """x: (N, C, H, W). Returns (N, C*sum(oh*ow), 1, 1), matching SPPLayer.forward."""
    assert pool_type in ("max_pool", "avg_pool")
    N, C, H, W = x.shape
    hw = H * W
    geoms = _level_geometry(H, W, num_levels)
    sizes = [oh * ow for (*_, oh, ow) in geoms]
    nfeat = sum(sizes)
    feat_pad = max(128, ((nfeat + 127) // 128) * 128)     # lane-dense output width

    Nb, vmem_limit = _pick_batch_block(N, C, hw, feat_pad, x.dtype)
    grid = int(pl.cdiv(N, Nb))
    Np = grid * Nb

    # Lane-dense input layout: (N, C, H*W); pad the batch instead of forcing a
    # divisor block (padded rows are discarded below).
    x_flat = x.reshape(N, C, hw)
    if Np != N:
        x_flat = jnp.pad(x_flat, ((0, Np - N), (0, 0), (0, 0)))

    kernel = functools.partial(
        _spp_kernel, geoms=tuple(geoms), pool_type=pool_type,
        height=H, width=W, feat_pad=feat_pad)

    out = pl.pallas_call(
        kernel,
        out_shape=jax.ShapeDtypeStruct((Np, C, feat_pad), x.dtype),
        grid_spec=pltpu.PrefetchScalarGridSpec(
            num_scalar_prefetch=0,
            grid=(grid,),
            in_specs=[pl.BlockSpec((Nb, C, hw), lambda n: (n, 0, 0))],
            out_specs=pl.BlockSpec((Nb, C, feat_pad), lambda n: (n, 0, 0)),
        ),
        compiler_params=pltpu.CompilerParams(
            dimension_semantics=("parallel",),
            vmem_limit_bytes=vmem_limit,
        ),
    )(x_flat)

    out = out[:N]
    # Wrapper-side layout plumbing (free in XLA): per-level slice -> c-major
    # flatten -> concat; equivalent to .view(num,-1) + torch.cat + 2x unsqueeze.
    feats, off = [], 0
    for sz in sizes:
        feats.append(out[:, :, off:off + sz].reshape(N, C * sz))
        off += sz
    spp = jnp.concatenate(feats, axis=1)
    return spp[:, :, None, None]


def _reference(x, num_levels, pool_type="max_pool"):
    N, C, H, W = x.shape
    feats = []
    for (kh, kw, ph, pw, _, _) in _level_geometry(H, W, num_levels):
        pads = [(0, 0), (0, 0), (ph, ph), (pw, pw)]
        if pool_type == "max_pool":
            pooled = lax.reduce_window(x, -jnp.inf, lax.max,
                                       (1, 1, kh, kw), (1, 1, kh, kw), pads)
        else:
            pooled = lax.reduce_window(x, 0.0, lax.add,
                                       (1, 1, kh, kw), (1, 1, kh, kw), pads) / (kh * kw)
        feats.append(pooled.reshape(N, -1))
    return jnp.concatenate(feats, axis=1)[:, :, None, None]


if __name__ == "__main__":
    key = jax.random.PRNGKey(0)
    N, C, H, W = 2, 4, 16, 16
    num_levels = 4
    x = jax.random.normal(key, (N, C, H, W), dtype=jnp.float32)

    total = C * sum(oh * ow for (*_, oh, ow) in _level_geometry(H, W, num_levels))

    # Default path of the module: max_pool.
    out = jax.block_until_ready(spp_layer(x, num_levels, pool_type="max_pool"))
    ref = _reference(x, num_levels, "max_pool")
    assert out.shape == (N, total, 1, 1) and out.dtype == x.dtype
    assert jnp.allclose(out, ref, atol=1e-6, rtol=1e-6), (
        float(jnp.max(jnp.abs(out - ref))))

    # avg_pool branch of the module (PyTorch default count_include_pad=True).
    out_avg = jax.block_until_ready(spp_layer(x, num_levels, pool_type="avg_pool"))
    ref_avg = _reference(x, num_levels, "avg_pool")
    assert jnp.allclose(out_avg, ref_avg, atol=1e-5, rtol=1e-5), (
        float(jnp.max(jnp.abs(out_avg - ref_avg))))

    print("KERNEL_OK")
</pallas_src>

<mosaic_0001>
module attributes {stable_mosaic.version = 11 : i64} {
  func.func @_spp_kernel(%arg0: i32, %arg1: memref<1x4x256xf32, #tpu.memory_space<vmem>>, %arg2: memref<1x4x128xf32, #tpu.memory_space<vmem>>) attributes {dimension_semantics = [#tpu.dimension_semantics<parallel>], iteration_bounds = array<i64: 2>, scalar_prefetch = 0 : i64, scratch_operands = 0 : i64, tpu.core_type = #tpu.core_type<tc>, window_params = [{transform_indices = @transform_0, window_bounds = array<i64: 1, 4, 256>}, {transform_indices = @transform_1, window_bounds = array<i64: 1, 4, 128>}]} {
    %c0 = arith.constant 0 : index
    %c0_0 = arith.constant 0 : index
    %c0_1 = arith.constant 0 : index
    %0 = vector.load %arg1[%c0, %c0_0, %c0_1] : memref<1x4x256xf32, #tpu.memory_space<vmem>>, vector<1x4x256xf32>
    %1 = vector.extract_strided_slice %0 {offsets = [0, 0, 0], sizes = [1, 4, 16], strides = [1, 1, 1]} : vector<1x4x256xf32> to vector<1x4x16xf32>
    %2 = vector.extract_strided_slice %0 {offsets = [0, 0, 16], sizes = [1, 4, 16], strides = [1, 1, 1]} : vector<1x4x256xf32> to vector<1x4x16xf32>
    %3 = arith.maximumf %1, %2 : vector<1x4x16xf32>
    %4 = vector.extract_strided_slice %0 {offsets = [0, 0, 32], sizes = [1, 4, 16], strides = [1, 1, 1]} : vector<1x4x256xf32> to vector<1x4x16xf32>
    %5 = arith.maximumf %3, %4 : vector<1x4x16xf32>
    %6 = vector.extract_strided_slice %0 {offsets = [0, 0, 48], sizes = [1, 4, 16], strides = [1, 1, 1]} : vector<1x4x256xf32> to vector<1x4x16xf32>
    %7 = arith.maximumf %5, %6 : vector<1x4x16xf32>
    %8 = vector.extract_strided_slice %0 {offsets = [0, 0, 64], sizes = [1, 4, 16], strides = [1, 1, 1]} : vector<1x4x256xf32> to vector<1x4x16xf32>
    %9 = arith.maximumf %7, %8 : vector<1x4x16xf32>
    %10 = vector.extract_strided_slice %0 {offsets = [0, 0, 80], sizes = [1, 4, 16], strides = [1, 1, 1]} : vector<1x4x256xf32> to vector<1x4x16xf32>
    %11 = arith.maximumf %9, %10 : vector<1x4x16xf32>
    %12 = vector.extract_strided_slice %0 {offsets = [0, 0, 96], sizes = [1, 4, 16], strides = [1, 1, 1]} : vector<1x4x256xf32> to vector<1x4x16xf32>
    %13 = arith.maximumf %11, %12 : vector<1x4x16xf32>
    %14 = vector.extract_strided_slice %0 {offsets = [0, 0, 112], sizes = [1, 4, 16], strides = [1, 1, 1]} : vector<1x4x256xf32> to vector<1x4x16xf32>
    %15 = arith.maximumf %13, %14 : vector<1x4x16xf32>
    %16 = vector.extract_strided_slice %0 {offsets = [0, 0, 128], sizes = [1, 4, 16], strides = [1, 1, 1]} : vector<1x4x256xf32> to vector<1x4x16xf32>
    %17 = arith.maximumf %15, %16 : vector<1x4x16xf32>
    %18 = vector.extract_strided_slice %0 {offsets = [0, 0, 144], sizes = [1, 4, 16], strides = [1, 1, 1]} : vector<1x4x256xf32> to vector<1x4x16xf32>
    %19 = arith.maximumf %17, %18 : vector<1x4x16xf32>
    %20 = vector.extract_strided_slice %0 {offsets = [0, 0, 160], sizes = [1, 4, 16], strides = [1, 1, 1]} : vector<1x4x256xf32> to vector<1x4x16xf32>
    %21 = arith.maximumf %19, %20 : vector<1x4x16xf32>
    %22 = vector.extract_strided_slice %0 {offsets = [0, 0, 176], sizes = [1, 4, 16], strides = [1, 1, 1]} : vector<1x4x256xf32> to vector<1x4x16xf32>
    %23 = arith.maximumf %21, %22 : vector<1x4x16xf32>
    %24 = vector.extract_strided_slice %0 {offsets = [0, 0, 192], sizes = [1, 4, 16], strides = [1, 1, 1]} : vector<1x4x256xf32> to vector<1x4x16xf32>
    %25 = arith.maximumf %23, %24 : vector<1x4x16xf32>
    %26 = vector.extract_strided_slice %0 {offsets = [0, 0, 208], sizes = [1, 4, 16], strides = [1, 1, 1]} : vector<1x4x256xf32> to vector<1x4x16xf32>
    %27 = arith.maximumf %25, %26 : vector<1x4x16xf32>
    %28 = vector.extract_strided_slice %0 {offsets = [0, 0, 224], sizes = [1, 4, 16], strides = [1, 1, 1]} : vector<1x4x256xf32> to vector<1x4x16xf32>
    %29 = arith.maximumf %27, %28 : vector<1x4x16xf32>
    %30 = vector.extract_strided_slice %0 {offsets = [0, 0, 240], sizes = [1, 4, 16], strides = [1, 1, 1]} : vector<1x4x256xf32> to vector<1x4x16xf32>
    %31 = arith.maximumf %29, %30 : vector<1x4x16xf32>
    %cst = arith.constant dense<0xFF800000> : vector<1x4xf32>
    %32 = vector.multi_reduction <maximumf>, %31, %cst [2] : vector<1x4x16xf32> to vector<1x4xf32>
    %33 = vector.shape_cast %32 : vector<1x4xf32> to vector<1x4x1xf32>
    %34 = vector.extract_strided_slice %0 {offsets = [0, 0, 0], sizes = [1, 4, 16], strides = [1, 1, 1]} : vector<1x4x256xf32> to vector<1x4x16xf32>
    %35 = vector.extract_strided_slice %0 {offsets = [0, 0, 16], sizes = [1, 4, 16], strides = [1, 1, 1]} : vector<1x4x256xf32> to vector<1x4x16xf32>
    %36 = arith.maximumf %34, %35 : vector<1x4x16xf32>
    %37 = vector.extract_strided_slice %0 {offsets = [0, 0, 32], sizes = [1, 4, 16], strides = [1, 1, 1]} : vector<1x4x256xf32> to vector<1x4x16xf32>
    %38 = arith.maximumf %36, %37 : vector<1x4x16xf32>
    %39 = vector.extract_strided_slice %0 {offsets = [0, 0, 48], sizes = [1, 4, 16], strides = [1, 1, 1]} : vector<1x4x256xf32> to vector<1x4x16xf32>
    %40 = arith.maximumf %38, %39 : vector<1x4x16xf32>
    %41 = vector.extract_strided_slice %0 {offsets = [0, 0, 64], sizes = [1, 4, 16], strides = [1, 1, 1]} : vector<1x4x256xf32> to vector<1x4x16xf32>
    %42 = arith.maximumf %40, %41 : vector<1x4x16xf32>
    %43 = vector.extract_strided_slice %0 {offsets = [0, 0, 80], sizes = [1, 4, 16], strides = [1, 1, 1]} : vector<1x4x256xf32> to vector<1x4x16xf32>
    %44 = arith.maximumf %42, %43 : vector<1x4x16xf32>
    %45 = vector.extract_strided_slice %0 {offsets = [0, 0, 96], sizes = [1, 4, 16], strides = [1, 1, 1]} : vector<1x4x256xf32> to vector<1x4x16xf32>
    %46 = arith.maximumf %44, %45 : vector<1x4x16xf32>
    %47 = vector.extract_strided_slice %0 {offsets = [0, 0, 112], sizes = [1, 4, 16], strides = [1, 1, 1]} : vector<1x4x256xf32> to vector<1x4x16xf32>
    %48 = arith.maximumf %46, %47 : vector<1x4x16xf32>
    %49 = vector.extract_strided_slice %48 {offsets = [0, 0, 0], sizes = [1, 4, 8], strides = [1, 1, 1]} : vector<1x4x16xf32> to vector<1x4x8xf32>
    %cst_2 = arith.constant dense<0xFF800000> : vector<1x4xf32>
    %50 = vector.multi_reduction <maximumf>, %49, %cst_2 [2] : vector<1x4x8xf32> to vector<1x4xf32>
    %51 = vector.shape_cast %50 : vector<1x4xf32> to vector<1x4x1xf32>
    %52 = vector.extract_strided_slice %48 {offsets = [0, 0, 8], sizes = [1, 4, 8], strides = [1, 1, 1]} : vector<1x4x16xf32> to vector<1x4x8xf32>
    %cst_3 = arith.constant dense<0xFF800000> : vector<1x4xf32>
    %53 = vector.multi_reduction <maximumf>, %52, %cst_3 [2] : vector<1x4x8xf32> to vector<1x4xf32>
    %54 = vector.shape_cast %53 : vector<1x4xf32> to vector<1x4x1xf32>
    %55 = vector.extract_strided_slice %0 {offsets = [0, 0, 128], sizes = [1, 4, 16], strides = [1, 1, 1]} : vector<1x4x256xf32> to vector<1x4x16xf32>
    %56 = vector.extract_strided_slice %0 {offsets = [0, 0, 144], sizes = [1, 4, 16], strides = [1, 1, 1]} : vector<1x4x256xf32> to vector<1x4x16xf32>
    %57 = arith.maximumf %55, %56 : vector<1x4x16xf32>
    %58 = vector.extract_strided_slice %0 {offsets = [0, 0, 160], sizes = [1, 4, 16], strides = [1, 1, 1]} : vector<1x4x256xf32> to vector<1x4x16xf32>
    %59 = arith.maximumf %57, %58 : vector<1x4x16xf32>
    %60 = vector.extract_strided_slice %0 {offsets = [0, 0, 176], sizes = [1, 4, 16], strides = [1, 1, 1]} : vector<1x4x256xf32> to vector<1x4x16xf32>
    %61 = arith.maximumf %59, %60 : vector<1x4x16xf32>
    %62 = vector.extract_strided_slice %0 {offsets = [0, 0, 192], sizes = [1, 4, 16], strides = [1, 1, 1]} : vector<1x4x256xf32> to vector<1x4x16xf32>
    %63 = arith.maximumf %61, %62 : vector<1x4x16xf32>
    %64 = vector.extract_strided_slice %0 {offsets = [0, 0, 208], sizes = [1, 4, 16], strides = [1, 1, 1]} : vector<1x4x256xf32> to vector<1x4x16xf32>
    %65 = arith.maximumf %63, %64 : vector<1x4x16xf32>
    %66 = vector.extract_strided_slice %0 {offsets = [0, 0, 224], sizes = [1, 4, 16], strides = [1, 1, 1]} : vector<1x4x256xf32> to vector<1x4x16xf32>
    %67 = arith.maximumf %65, %66 : vector<1x4x16xf32>
    %68 = vector.extract_strided_slice %0 {offsets = [0, 0, 240], sizes = [1, 4, 16], strides = [1, 1, 1]} : vector<1x4x256xf32> to vector<1x4x16xf32>
    %69 = arith.maximumf %67, %68 : vector<1x4x16xf32>
    %70 = vector.extract_strided_slice %69 {offsets = [0, 0, 0], sizes = [1, 4, 8], strides = [1, 1, 1]} : vector<1x4x16xf32> to vector<1x4x8xf32>
    %cst_4 = arith.constant dense<0xFF800000> : vector<1x4xf32>
    %71 = vector.multi_reduction <maximumf>, %70, %cst_4 [2] : vector<1x4x8xf32> to vector<1x4xf32>
    %72 = vector.shape_cast %71 : vector<1x4xf32> to vector<1x4x1xf32>
    %73 = vector.extract_strided_slice %69 {offsets = [0, 0, 8], sizes = [1, 4, 8], strides = [1, 1, 1]} : vector<1x4x16xf32> to vector<1x4x8xf32>
    %cst_5 = arith.constant dense<0xFF800000> : vector<1x4xf32>
    %74 = vector.multi_reduction <maximumf>, %73, %cst_5 [2] : vector<1x4x8xf32> to vector<1x4xf32>
    %75 = vector.shape_cast %74 : vector<1x4xf32> to vector<1x4x1xf32>
    %76 = vector.extract_strided_slice %0 {offsets = [0, 0, 0], sizes = [1, 4, 16], strides = [1, 1, 1]} : vector<1x4x256xf32> to vector<1x4x16xf32>
    %77 = vector.extract_strided_slice %0 {offsets = [0, 0, 16], sizes = [1, 4, 16], strides = [1, 1, 1]} : vector<1x4x256xf32> to vector<1x4x16xf32>
    %78 = arith.maximumf %76, %77 : vector<1x4x16xf32>
    %79 = vector.extract_strided_slice %0 {offsets = [0, 0, 32], sizes = [1, 4, 16], strides = [1, 1, 1]} : vector<1x4x256xf32> to vector<1x4x16xf32>
    %80 = arith.maximumf %78, %79 : vector<1x4x16xf32>
    %81 = vector.extract_strided_slice %0 {offsets = [0, 0, 48], sizes = [1, 4, 16], strides = [1, 1, 1]} : vector<1x4x256xf32> to vector<1x4x16xf32>
    %82 = arith.maximumf %80, %81 : vector<1x4x16xf32>
    %83 = vector.extract_strided_slice %0 {offsets = [0, 0, 64], sizes = [1, 4, 16], strides = [1, 1, 1]} : vector<1x4x256xf32> to vector<1x4x16xf32>
    %84 = arith.maximumf %82, %83 : vector<1x4x16xf32>
    %85 = vector.extract_strided_slice %84 {offsets = [0, 0, 0], sizes = [1, 4, 5], strides = [1, 1, 1]} : vector<1x4x16xf32> to vector<1x4x5xf32>
    %cst_6 = arith.constant dense<0xFF800000> : vector<1x4xf32>
    %86 = vector.multi_reduction <maximumf>, %85, %cst_6 [2] : vector<1x4x5xf32> to vector<1x4xf32>
    %87 = vector.shape_cast %86 : vector<1x4xf32> to vector<1x4x1xf32>
    %88 = vector.extract_strided_slice %84 {offsets = [0, 0, 5], sizes = [1, 4, 6], strides = [1, 1, 1]} : vector<1x4x16xf32> to vector<1x4x6xf32>
    %cst_7 = arith.constant dense<0xFF800000> : vector<1x4xf32>
    %89 = vector.multi_reduction <maximumf>, %88, %cst_7 [2] : vector<1x4x6xf32> to vector<1x4xf32>
    %90 = vector.shape_cast %89 : vector<1x4xf32> to vector<1x4x1xf32>
    %91 = vector.extract_strided_slice %84 {offsets = [0, 0, 11], sizes = [1, 4, 5], strides = [1, 1, 1]} : vector<1x4x16xf32> to vector<1x4x5xf32>
    %cst_8 = arith.constant dense<0xFF800000> : vector<1x4xf32>
    %92 = vector.multi_reduction <maximumf>, %91, %cst_8 [2] : vector<1x4x5xf32> to vector<1x4xf32>
    %93 = vector.shape_cast %92 : vector<1x4xf32> to vector<1x4x1xf32>
    %94 = vector.extract_strided_slice %0 {offsets = [0, 0, 80], sizes = [1, 4, 16], strides = [1, 1, 1]} : vector<1x4x256xf32> to vector<1x4x16xf32>
    %95 = vector.extract_strided_slice %0 {offsets = [0, 0, 96], sizes = [1, 4, 16], strides = [1, 1, 1]} : vector<1x4x256xf32> to vector<1x4x16xf32>
    %96 = arith.maximumf %94, %95 : vector<1x4x16xf32>
    %97 = vector.extract_strided_slice %0 {offsets = [0, 0, 112], sizes = [1, 4, 16], strides = [1, 1, 1]} : vector<1x4x256xf32> to vector<1x4x16xf32>
    %98 = arith.maximumf %96, %97 : vector<1x4x16xf32>
    %99 = vector.extract_strided_slice %0 {offsets = [0, 0, 128], sizes = [1, 4, 16], strides = [1, 1, 1]} : vector<1x4x256xf32> to vector<1x4x16xf32>
    %100 = arith.maximumf %98, %99 : vector<1x4x16xf32>
    %101 = vector.extract_strided_slice %0 {offsets = [0, 0, 144], sizes = [1, 4, 16], strides = [1, 1, 1]} : vector<1x4x256xf32> to vector<1x4x16xf32>
    %102 = arith.maximumf %100, %101 : vector<1x4x16xf32>
    %103 = vector.extract_strided_slice %0 {offsets = [0, 0, 160], sizes = [1, 4, 16], strides = [1, 1, 1]} : vector<1x4x256xf32> to vector<1x4x16xf32>
    %104 = arith.maximumf %102, %103 : vector<1x4x16xf32>
    %105 = vector.extract_strided_slice %104 {offsets = [0, 0, 0], sizes = [1, 4, 5], strides = [1, 1, 1]} : vector<1x4x16xf32> to vector<1x4x5xf32>
    %cst_9 = arith.constant dense<0xFF800000> : vector<1x4xf32>
    %106 = vector.multi_reduction <maximumf>, %105, %cst_9 [2] : vector<1x4x5xf32> to vector<1x4xf32>
    %107 = vector.shape_cast %106 : vector<1x4xf32> to vector<1x4x1xf32>
    %108 = vector.extract_strided_slice %104 {offsets = [0, 0, 5], sizes = [1, 4, 6], strides = [1, 1, 1]} : vector<1x4x16xf32> to vector<1x4x6xf32>
    %cst_10 = arith.constant dense<0xFF800000> : vector<1x4xf32>
    %109 = vector.multi_reduction <maximumf>, %108, %cst_10 [2] : vector<1x4x6xf32> to vector<1x4xf32>
    %110 = vector.shape_cast %109 : vector<1x4xf32> to vector<1x4x1xf32>
    %111 = vector.extract_strided_slice %104 {offsets = [0, 0, 11], sizes = [1, 4, 5], strides = [1, 1, 1]} : vector<1x4x16xf32> to vector<1x4x5xf32>
    %cst_11 = arith.constant dense<0xFF800000> : vector<1x4xf32>
    %112 = vector.multi_reduction <maximumf>, %111, %cst_11 [2] : vector<1x4x5xf32> to vector<1x4xf32>
    %113 = vector.shape_cast %112 : vector<1x4xf32> to vector<1x4x1xf32>
    %114 = vector.extract_strided_slice %0 {offsets = [0, 0, 176], sizes = [1, 4, 16], strides = [1, 1, 1]} : vector<1x4x256xf32> to vector<1x4x16xf32>
    %115 = vector.extract_strided_slice %0 {offsets = [0, 0, 192], sizes = [1, 4, 16], strides = [1, 1, 1]} : vector<1x4x256xf32> to vector<1x4x16xf32>
    %116 = arith.maximumf %114, %115 : vector<1x4x16xf32>
    %117 = vector.extract_strided_slice %0 {offsets = [0, 0, 208], sizes = [1, 4, 16], strides = [1, 1, 1]} : vector<1x4x256xf32> to vector<1x4x16xf32>
    %118 = arith.maximumf %116, %117 : vector<1x4x16xf32>
    %119 = vector.extract_strided_slice %0 {offsets = [0, 0, 224], sizes = [1, 4, 16], strides = [1, 1, 1]} : vector<1x4x256xf32> to vector<1x4x16xf32>
    %120 = arith.maximumf %118, %119 : vector<1x4x16xf32>
    %121 = vector.extract_strided_slice %0 {offsets = [0, 0, 240], sizes = [1, 4, 16], strides = [1, 1, 1]} : vector<1x4x256xf32> to vector<1x4x16xf32>
    %122 = arith.maximumf %120, %121 : vector<1x4x16xf32>
    %123 = vector.extract_strided_slice %122 {offsets = [0, 0, 0], sizes = [1, 4, 5], strides = [1, 1, 1]} : vector<1x4x16xf32> to vector<1x4x5xf32>
    %cst_12 = arith.constant dense<0xFF800000> : vector<1x4xf32>
    %124 = vector.multi_reduction <maximumf>, %123, %cst_12 [2] : vector<1x4x5xf32> to vector<1x4xf32>
    %125 = vector.shape_cast %124 : vector<1x4xf32> to vector<1x4x1xf32>
    %126 = vector.extract_strided_slice %122 {offsets = [0, 0, 5], sizes = [1, 4, 6], strides = [1, 1, 1]} : vector<1x4x16xf32> to vector<1x4x6xf32>
    %cst_13 = arith.constant dense<0xFF800000> : vector<1x4xf32>
    %127 = vector.multi_reduction <maximumf>, %126, %cst_13 [2] : vector<1x4x6xf32> to vector<1x4xf32>
    %128 = vector.shape_cast %127 : vector<1x4xf32> to vector<1x4x1xf32>
    %129 = vector.extract_strided_slice %122 {offsets = [0, 0, 11], sizes = [1, 4, 5], strides = [1, 1, 1]} : vector<1x4x16xf32> to vector<1x4x5xf32>
    %cst_14 = arith.constant dense<0xFF800000> : vector<1x4xf32>
    %130 = vector.multi_reduction <maximumf>, %129, %cst_14 [2] : vector<1x4x5xf32> to vector<1x4xf32>
    %131 = vector.shape_cast %130 : vector<1x4xf32> to vector<1x4x1xf32>
    %132 = vector.extract_strided_slice %0 {offsets = [0, 0, 0], sizes = [1, 4, 16], strides = [1, 1, 1]} : vector<1x4x256xf32> to vector<1x4x16xf32>
    %133 = vector.extract_strided_slice %0 {offsets = [0, 0, 16], sizes = [1, 4, 16], strides = [1, 1, 1]} : vector<1x4x256xf32> to vector<1x4x16xf32>
    %134 = arith.maximumf %132, %133 : vector<1x4x16xf32>
    %135 = vector.extract_strided_slice %0 {offsets = [0, 0, 32], sizes = [1, 4, 16], strides = [1, 1, 1]} : vector<1x4x256xf32> to vector<1x4x16xf32>
    %136 = arith.maximumf %134, %135 : vector<1x4x16xf32>
    %137 = vector.extract_strided_slice %0 {offsets = [0, 0, 48], sizes = [1, 4, 16], strides = [1, 1, 1]} : vector<1x4x256xf32> to vector<1x4x16xf32>
    %138 = arith.maximumf %136, %137 : vector<1x4x16xf32>
    %139 = vector.extract_strided_slice %138 {offsets = [0, 0, 0], sizes = [1, 4, 4], strides = [1, 1, 1]} : vector<1x4x16xf32> to vector<1x4x4xf32>
    %cst_15 = arith.constant dense<0xFF800000> : vector<1x4xf32>
    %140 = vector.multi_reduction <maximumf>, %139, %cst_15 [2] : vector<1x4x4xf32> to vector<1x4xf32>
    %141 = vector.shape_cast %140 : vector<1x4xf32> to vector<1x4x1xf32>
    %142 = vector.extract_strided_slice %138 {offsets = [0, 0, 4], sizes = [1, 4, 4], strides = [1, 1, 1]} : vector<1x4x16xf32> to vector<1x4x4xf32>
    %cst_16 = arith.constant dense<0xFF800000> : vector<1x4xf32>
    %143 = vector.multi_reduction <maximumf>, %142, %cst_16 [2] : vector<1x4x4xf32> to vector<1x4xf32>
    %144 = vector.shape_cast %143 : vector<1x4xf32> to vector<1x4x1xf32>
    %145 = vector.extract_strided_slice %138 {offsets = [0, 0, 8], sizes = [1, 4, 4], strides = [1, 1, 1]} : vector<1x4x16xf32> to vector<1x4x4xf32>
    %cst_17 = arith.constant dense<0xFF800000> : vector<1x4xf32>
    %146 = vector.multi_reduction <maximumf>, %145, %cst_17 [2] : vector<1x4x4xf32> to vector<1x4xf32>
    %147 = vector.shape_cast %146 : vector<1x4xf32> to vector<1x4x1xf32>
    %148 = vector.extract_strided_slice %138 {offsets = [0, 0, 12], sizes = [1, 4, 4], strides = [1, 1, 1]} : vector<1x4x16xf32> to vector<1x4x4xf32>
    %cst_18 = arith.constant dense<0xFF800000> : vector<1x4xf32>
    %149 = vector.multi_reduction <maximumf>, %148, %cst_18 [2] : vector<1x4x4xf32> to vector<1x4xf32>
    %150 = vector.shape_cast %149 : vector<1x4xf32> to vector<1x4x1xf32>
    %151 = vector.extract_strided_slice %0 {offsets = [0, 0, 64], sizes = [1, 4, 16], strides = [1, 1, 1]} : vector<1x4x256xf32> to vector<1x4x16xf32>
    %152 = vector.extract_strided_slice %0 {offsets = [0, 0, 80], sizes = [1, 4, 16], strides = [1, 1, 1]} : vector<1x4x256xf32> to vector<1x4x16xf32>
    %153 = arith.maximumf %151, %152 : vector<1x4x16xf32>
    %154 = vector.extract_strided_slice %0 {offsets = [0, 0, 96], sizes = [1, 4, 16], strides = [1, 1, 1]} : vector<1x4x256xf32> to vector<1x4x16xf32>
    %155 = arith.maximumf %153, %154 : vector<1x4x16xf32>
    %156 = vector.extract_strided_slice %0 {offsets = [0, 0, 112], sizes = [1, 4, 16], strides = [1, 1, 1]} : vector<1x4x256xf32> to vector<1x4x16xf32>
    %157 = arith.maximumf %155, %156 : vector<1x4x16xf32>
    %158 = vector.extract_strided_slice %157 {offsets = [0, 0, 0], sizes = [1, 4, 4], strides = [1, 1, 1]} : vector<1x4x16xf32> to vector<1x4x4xf32>
    %cst_19 = arith.constant dense<0xFF800000> : vector<1x4xf32>
    %159 = vector.multi_reduction <maximumf>, %158, %cst_19 [2] : vector<1x4x4xf32> to vector<1x4xf32>
    %160 = vector.shape_cast %159 : vector<1x4xf32> to vector<1x4x1xf32>
    %161 = vector.extract_strided_slice %157 {offsets = [0, 0, 4], sizes = [1, 4, 4], strides = [1, 1, 1]} : vector<1x4x16xf32> to vector<1x4x4xf32>
    %cst_20 = arith.constant dense<0xFF800000> : vector<1x4xf32>
    %162 = vector.multi_reduction <maximumf>, %161, %cst_20 [2] : vector<1x4x4xf32> to vector<1x4xf32>
    %163 = vector.shape_cast %162 : vector<1x4xf32> to vector<1x4x1xf32>
    %164 = vector.extract_strided_slice %157 {offsets = [0, 0, 8], sizes = [1, 4, 4], strides = [1, 1, 1]} : vector<1x4x16xf32> to vector<1x4x4xf32>
    %cst_21 = arith.constant dense<0xFF800000> : vector<1x4xf32>
    %165 = vector.multi_reduction <maximumf>, %164, %cst_21 [2] : vector<1x4x4xf32> to vector<1x4xf32>
    %166 = vector.shape_cast %165 : vector<1x4xf32> to vector<1x4x1xf32>
    %167 = vector.extract_strided_slice %157 {offsets = [0, 0, 12], sizes = [1, 4, 4], strides = [1, 1, 1]} : vector<1x4x16xf32> to vector<1x4x4xf32>
    %cst_22 = arith.constant dense<0xFF800000> : vector<1x4xf32>
    %168 = vector.multi_reduction <maximumf>, %167, %cst_22 [2] : vector<1x4x4xf32> to vector<1x4xf32>
    %169 = vector.shape_cast %168 : vector<1x4xf32> to vector<1x4x1xf32>
    %170 = vector.extract_strided_slice %0 {offsets = [0, 0, 128], sizes = [1, 4, 16], strides = [1, 1, 1]} : vector<1x4x256xf32> to vector<1x4x16xf32>
    %171 = vector.extract_strided_slice %0 {offsets = [0, 0, 144], sizes = [1, 4, 16], strides = [1, 1, 1]} : vector<1x4x256xf32> to vector<1x4x16xf32>
    %172 = arith.maximumf %170, %171 : vector<1x4x16xf32>
    %173 = vector.extract_strided_slice %0 {offsets = [0, 0, 160], sizes = [1, 4, 16], strides = [1, 1, 1]} : vector<1x4x256xf32> to vector<1x4x16xf32>
    %174 = arith.maximumf %172, %173 : vector<1x4x16xf32>
    %175 = vector.extract_strided_slice %0 {offsets = [0, 0, 176], sizes = [1, 4, 16], strides = [1, 1, 1]} : vector<1x4x256xf32> to vector<1x4x16xf32>
    %176 = arith.maximumf %174, %175 : vector<1x4x16xf32>
    %177 = vector.extract_strided_slice %176 {offsets = [0, 0, 0], sizes = [1, 4, 4], strides = [1, 1, 1]} : vector<1x4x16xf32> to vector<1x4x4xf32>
    %cst_23 = arith.constant dense<0xFF800000> : vector<1x4xf32>
    %178 = vector.multi_reduction <maximumf>, %177, %cst_23 [2] : vector<1x4x4xf32> to vector<1x4xf32>
    %179 = vector.shape_cast %178 : vector<1x4xf32> to vector<1x4x1xf32>
    %180 = vector.extract_strided_slice %176 {offsets = [0, 0, 4], sizes = [1, 4, 4], strides = [1, 1, 1]} : vector<1x4x16xf32> to vector<1x4x4xf32>
    %cst_24 = arith.constant dense<0xFF800000> : vector<1x4xf32>
    %181 = vector.multi_reduction <maximumf>, %180, %cst_24 [2] : vector<1x4x4xf32> to vector<1x4xf32>
    %182 = vector.shape_cast %181 : vector<1x4xf32> to vector<1x4x1xf32>
    %183 = vector.extract_strided_slice %176 {offsets = [0, 0, 8], sizes = [1, 4, 4], strides = [1, 1, 1]} : vector<1x4x16xf32> to vector<1x4x4xf32>
    %cst_25 = arith.constant dense<0xFF800000> : vector<1x4xf32>
    %184 = vector.multi_reduction <maximumf>, %183, %cst_25 [2] : vector<1x4x4xf32> to vector<1x4xf32>
    %185 = vector.shape_cast %184 : vector<1x4xf32> to vector<1x4x1xf32>
    %186 = vector.extract_strided_slice %176 {offsets = [0, 0, 12], sizes = [1, 4, 4], strides = [1, 1, 1]} : vector<1x4x16xf32> to vector<1x4x4xf32>
    %cst_26 = arith.constant dense<0xFF800000> : vector<1x4xf32>
    %187 = vector.multi_reduction <maximumf>, %186, %cst_26 [2] : vector<1x4x4xf32> to vector<1x4xf32>
    %188 = vector.shape_cast %187 : vector<1x4xf32> to vector<1x4x1xf32>
    %189 = vector.extract_strided_slice %0 {offsets = [0, 0, 192], sizes = [1, 4, 16], strides = [1, 1, 1]} : vector<1x4x256xf32> to vector<1x4x16xf32>
    %190 = vector.extract_strided_slice %0 {offsets = [0, 0, 208], sizes = [1, 4, 16], strides = [1, 1, 1]} : vector<1x4x256xf32> to vector<1x4x16xf32>
    %191 = arith.maximumf %189, %190 : vector<1x4x16xf32>
    %192 = vector.extract_strided_slice %0 {offsets = [0, 0, 224], sizes = [1, 4, 16], strides = [1, 1, 1]} : vector<1x4x256xf32> to vector<1x4x16xf32>
    %193 = arith.maximumf %191, %192 : vector<1x4x16xf32>
    %194 = vector.extract_strided_slice %0 {offsets = [0, 0, 240], sizes = [1, 4, 16], strides = [1, 1, 1]} : vector<1x4x256xf32> to vector<1x4x16xf32>
    %195 = arith.maximumf %193, %194 : vector<1x4x16xf32>
    %196 = vector.extract_strided_slice %195 {offsets = [0, 0, 0], sizes = [1, 4, 4], strides = [1, 1, 1]} : vector<1x4x16xf32> to vector<1x4x4xf32>
    %cst_27 = arith.constant dense<0xFF800000> : vector<1x4xf32>
    %197 = vector.multi_reduction <maximumf>, %196, %cst_27 [2] : vector<1x4x4xf32> to vector<1x4xf32>
    %198 = vector.shape_cast %197 : vector<1x4xf32> to vector<1x4x1xf32>
    %199 = vector.extract_strided_slice %195 {offsets = [0, 0, 4], sizes = [1, 4, 4], strides = [1, 1, 1]} : vector<1x4x16xf32> to vector<1x4x4xf32>
    %cst_28 = arith.constant dense<0xFF800000> : vector<1x4xf32>
    %200 = vector.multi_reduction <maximumf>, %199, %cst_28 [2] : vector<1x4x4xf32> to vector<1x4xf32>
    %201 = vector.shape_cast %200 : vector<1x4xf32> to vector<1x4x1xf32>
    %202 = vector.extract_strided_slice %195 {offsets = [0, 0, 8], sizes = [1, 4, 4], strides = [1, 1, 1]} : vector<1x4x16xf32> to vector<1x4x4xf32>
    %cst_29 = arith.constant dense<0xFF800000> : vector<1x4xf32>
    %203 = vector.multi_reduction <maximumf>, %202, %cst_29 [2] : vector<1x4x4xf32> to vector<1x4xf32>
    %204 = vector.shape_cast %203 : vector<1x4xf32> to vector<1x4x1xf32>
    %205 = vector.extract_strided_slice %195 {offsets = [0, 0, 12], sizes = [1, 4, 4], strides = [1, 1, 1]} : vector<1x4x16xf32> to vector<1x4x4xf32>
    %cst_30 = arith.constant dense<0xFF800000> : vector<1x4xf32>
    %206 = vector.multi_reduction <maximumf>, %205, %cst_30 [2] : vector<1x4x4xf32> to vector<1x4xf32>
    %207 = vector.shape_cast %206 : vector<1x4xf32> to vector<1x4x1xf32>
    %cst_31 = arith.constant 0.000000e+00 : f32
    %208 = vector.broadcast %cst_31 : f32 to vector<1x4x98xf32>
    %209 = tpu.concatenate %33, %51, %54, %72, %75, %87, %90, %93, %107, %110, %113, %125, %128, %131, %141, %144 in 2 : vector<1x4x1xf32>, vector<1x4x1xf32>, vector<1x4x1xf32>, vector<1x4x1xf32>, vector<1x4x1xf32>, vector<1x4x1xf32>, vector<1x4x1xf32>, vector<1x4x1xf32>, vector<1x4x1xf32>, vector<1x4x1xf32>, vector<1x4x1xf32>, vector<1x4x1xf32>, vector<1x4x1xf32>, vector<1x4x1xf32>, vector<1x4x1xf32>, vector<1x4x1xf32> -> vector<1x4x16xf32>
    %210 = tpu.concatenate %147, %150, %160, %163, %166, %169, %179, %182, %185, %188, %198, %201, %204, %207, %208 in 2 : vector<1x4x1xf32>, vector<1x4x1xf32>, vector<1x4x1xf32>, vector<1x4x1xf32>, vector<1x4x1xf32>, vector<1x4x1xf32>, vector<1x4x1xf32>, vector<1x4x1xf32>, vector<1x4x1xf32>, vector<1x4x1xf32>, vector<1x4x1xf32>, vector<1x4x1xf32>, vector<1x4x1xf32>, vector<1x4x1xf32>, vector<1x4x98xf32> -> vector<1x4x112xf32>
    %211 = tpu.concatenate %209, %210 in 2 : vector<1x4x16xf32>, vector<1x4x112xf32> -> vector<1x4x128xf32>
    %c0_32 = arith.constant 0 : index
    %c0_33 = arith.constant 0 : index
    %c0_34 = arith.constant 0 : index
    %212 = vector.load %arg2[%c0_32, %c0_33, %c0_34] : memref<1x4x128xf32, #tpu.memory_space<vmem>>, vector<1x4x128xf32>
    tpu.vector_store %arg2[%c0_32, %c0_33, %c0_34], %211 {strides = array<i32>} : memref<1x4x128xf32, #tpu.memory_space<vmem>>, vector<1x4x128xf32>,
    return
  }
  func.func @transform_0(%arg0: i32) -> (i32, i32, i32) {
    %c0_i32 = arith.constant 0 : i32
    %c0_i32_0 = arith.constant 0 : i32
    %c0_i32_1 = arith.constant 0 : i32
    return %arg0, %c0_i32, %c0_i32_0 : i32, i32, i32
  }
  func.func @transform_1(%arg0: i32) -> (i32, i32, i32) {
    %c0_i32 = arith.constant 0 : i32
    %c0_i32_0 = arith.constant 0 : i32
    %c0_i32_1 = arith.constant 0 : i32
    return %arg0, %c0_i32, %c0_i32_0 : i32, i32, i32
  }
}

</mosaic_0001>

<llo_original>
// kernel: tpu_custom_call.1
$region0: #{tpu_custom_call.1}
  #allocation0 [shape = 'u32[]', space=smem, size = 0x4, offset = 0x4, fixed_abs, tag = 'smem constant byte address 0x4 - core index']
  #allocation1 [shape = 'u32[144,128]{1,0:T(1,128)}', space=vmem, size = 0x12000, scoped, tag = 'internal scratch']
  %s0 = inlined_call_operand.hbm [shape: f32[2,4,256], index: 0, kind: input, shape index: {}]
  %s1 = inlined_call_operand.hbm [shape: f32[2,4,128], index: 1, kind: output, shape index: {}]
  %s2 = sld [smem:[#allocation0]]
  $region41: #{tpu_custom_call.1} parent=0
    _
  %s4 = ssub.s32 1, %s2
  %s5 = scalar_select 0, %s4, %s2
  $region1: #{tpu_custom_call.1} parent=0
    #allocation2 [shape = 'u8[8192]{0}', space=vmem, size = 0x2000, scoped, tag = 'input window, operand 0']
    #allocation3 [shape = 's32[2]{0}', space=sflag, size = 0x8, scoped, tag = 'scoped memory for tpu_custom_call.1']
    #allocation4 [shape = 's32[2]{0}', space=sflag, size = 0x8, scoped, tag = 'scoped memory for tpu_custom_call.1']
    #allocation5 [shape = 'u8[4096]{0}', space=vmem, size = 0x1000, scoped, tag = 'output window, operand 0']
    %6 = vsyncpa [#allocation3], 0
    %s7 = scalar_lea.sflag [#allocation3], 1
    %8 = vsyncpa %s7, 0
    %9 = vsyncpa [#allocation4], 0
    %s10 = scalar_lea.sflag [#allocation4], 1
    %11 = vsyncpa %s10, 0
    loop: start=0, step=1, limit=4
    $region2: #{tpu_custom_call.1} parent=1 // loop_pre_header
      _
    $region3: #{tpu_custom_call.1} parent=1 // loop_header
      %s13 = sphi 0, %s17
      %p14 = scmp.ge.s32.totalorder %s13, 4
      %s23 = sphi 0, %s25
      %s26 = sphi 0, %s23
      %s27 = sphi 0, %s26
      %s43 = sphi 0, %s27
      %s49 = sphi 0, %s51
      %s52 = sphi 0, %s49
      %s53 = sphi 0, %s52
      %s69 = sphi 0, %s53
    $region4: #{tpu_custom_call.1} parent=1 // loop_header_branch
      %16 = sbr.rel (%p14) target = $region8
    $region5: #{tpu_custom_call.1} parent=1 // loop_body
      %s18 = ssub.s32 %s13, 1
      %s19 = ssub.s32 %s13, 2
      %s20 = sadd.s32 %s13, 1
      %s21 = ssub.s32 %s13, %s20
      %p22 = scmp.eq.s32.totalorder %s21, 0
      %s24 = sadd.s32 %s23, 1
      %s25 = scalar_select %p22, %s23, %s24
      %p28 = pneg %p22
      %p29 = scmp.eq.s32.totalorder %s13, 1
      %p30 = por %p28, %p29
      %p31 = scmp.ne.s32.totalorder %s23, %s26
      %p32 = scmp.eq.s32.totalorder %s13, 0
      %p33 = por %p31, %p32
      %p34 = scmp.ne.s32.totalorder %s23, %s26
      %p35 = scmp.eq.s32.totalorder %s18, 1
      %p36 = por %p34, %p35
      %p37 = scmp.ne.s32.totalorder %s26, %s27
      %p38 = scmp.eq.s32.totalorder %s18, 0
      %p39 = por %p37, %p38
      %p40 = scmp.ne.s32.totalorder %s26, %s27
      %p41 = scmp.eq.s32.totalorder %s19, 1
      %p42 = por %p40, %p41
      %p44 = scmp.ne.s32.totalorder %s27, %s43
      %p45 = scmp.eq.s32.totalorder %s19, 0
      %p46 = por %p44, %p45
      %s47 = ssub.s32 %s13, %s20
      %p48 = scmp.eq.s32.totalorder %s47, 0
      %s50 = sadd.s32 %s49, 1
      %s51 = scalar_select %p48, %s49, %s50
      %p54 = pneg %p48
      %p55 = scmp.eq.s32.totalorder %s13, 1
      %p56 = por %p54, %p55
      %p57 = scmp.ne.s32.totalorder %s49, %s52
      %p58 = scmp.eq.s32.totalorder %s13, 0
      %p59 = por %p57, %p58
      %p60 = scmp.ne.s32.totalorder %s49, %s52
      %p61 = scmp.eq.s32.totalorder %s18, 1
      %p62 = por %p60, %p61
      %p63 = scmp.ne.s32.totalorder %s52, %s53
      %p64 = scmp.eq.s32.totalorder %s18, 0
      %p65 = por %p63, %p64
      %p66 = scmp.ne.s32.totalorder %s52, %s53
      %p67 = scmp.eq.s32.totalorder %s19, 1
      %p68 = por %p66, %p67
      %p70 = scmp.ne.s32.totalorder %s53, %s69
      %p71 = scmp.eq.s32.totalorder %s19, 0
      %p72 = por %p70, %p71
      %p73 = scmp.le.s32.totalorder 1, %s13
      %p74 = scmp.lt.s32.totalorder %s13, 3
      %p75 = pnand %p73, %p74
      %p76 = pneg %p75
      // Predicated region
      $region9: #{tpu_custom_call.1} parent=5 // pred_check
        _
      $region10: #{tpu_custom_call.1} parent=5 // pred_check_branch
        %78 = sbr.rel (%p75) target = $region12
      $region11: #{tpu_custom_call.1} parent=5 // pred_region
        %s79 = ssub.s32 %s13, 1
      $region12: #{tpu_custom_call.1} parent=5 // pred_fallthru
        _
      %p80 = scmp.lt.s32.totalorder %s13, 2
      // Predicated region
      $region13: #{tpu_custom_call.1} parent=5 // pred_check
        %p81 = pneg %p80
      $region14: #{tpu_custom_call.1} parent=5 // pred_check_branch
        %83 = sbr.rel (%p81) target = $region16
      $region15: #{tpu_custom_call.1} parent=5 // pred_region
        // Predicated region
        $region17: #{tpu_custom_call.1} parent=15 // pred_check
          %p84 = pneg %p33
        $region18: #{tpu_custom_call.1} parent=15 // pred_check_branch
          %86 = sbr.rel (%p84) target = $region20
        $region19: #{tpu_custom_call.1} parent=15 // pred_region
          %s87 = sand.u32 %s23, 1
          %s88 = scalar_lea.sflag [#allocation3], %s87
          %s89 = sand.u32 %s23, 1
          %s90 = smul.addr %s89, 8
          %s91 = scalar_lea.vmem [#allocation2], %s90
          %s93 = ssub.s32 128, 128
          %94 = vsyncadd %s88, %s93
          %s95 = smul.addr %s13, 2
          %s96 = smul.addr %s95, 64
          %s97 = scalar_lea.hbm %s0, %s96
          %s99 = sshll.u32 %s91, 4
          %s100 = int_to_ptr.vmem [resolvable:$true] %s99
          %102 = dma.hbm_to_vmem [thread:$0]  %s97, 128, %s100, %s88
        $region20: #{tpu_custom_call.1} parent=15 // pred_fallthru
          _
      $region16: #{tpu_custom_call.1} parent=5 // pred_fallthru
        _
      %p103 = scmp.le.s32.totalorder 1, %s13
      %p104 = scmp.lt.s32.totalorder %s13, 3
      %p105 = pnand %p103, %p104
      %p106 = pneg %p105
      // Predicated region
      $region21: #{tpu_custom_call.1} parent=5 // pred_check
        _
      $region22: #{tpu_custom_call.1} parent=5 // pred_check_branch
        %108 = sbr.rel (%p105) target = $region24
      $region23: #{tpu_custom_call.1} parent=5 // pred_region
        %s109 = ssub.s32 %s13, 1
        %s110 = sand.u32 %s26, 1
        %s111 = scalar_lea.sflag [#allocation3], %s110
        %s112 = sand.u32 %s26, 1
        %s113 = smul.addr %s112, 8
        %s114 = scalar_lea.vmem [#allocation2], %s113
        // Predicated region
        $region25: #{tpu_custom_call.1} parent=23 // pred_check
          %p115 = pneg %p39
        $region26: #{tpu_custom_call.1} parent=23 // pred_check_branch
          %117 = sbr.rel (%p115) target = $region28
        $region27: #{tpu_custom_call.1} parent=23 // pred_region
          %118 = dma.done %s111, 128
        $region28: #{tpu_custom_call.1} parent=23 // pred_fallthru
          _
        %s119 = sand.u32 %s26, 1
        %s120 = scalar_lea.sflag [#allocation3], %s119
        %s121 = sand.u32 %s26, 1
        %s122 = smul.addr %s121, 8
        %s123 = scalar_lea.vmem [#allocation2], %s122
        %p124 = pneg %p39
        %p125 = pneg %p36
        %p126 = pneg %p65
        %p127 = pneg %p62
        %s128 = sand.u32 %s52, 1
        %s129 = scalar_lea.sflag [#allocation4], %s128
        %s130 = sand.u32 %s52, 1
        %s131 = smul.addr %s130, 4
        %s132 = scalar_lea.vmem [#allocation5], %s131
        %v133 = vld [vmem:[%s114] sm:$0xff]
        %135 = vrot.lane.b32.xlu0 %v133, 112
        %v136 = vpop.permute.xlu0 %135
        %v138 = vmax.f32 %v133, %v136
        %139 = vrot.lane.b32.xlu0 %v133, 96
        %v140 = vpop.permute.xlu0 %139
        %v142 = vmax.f32 %v138, %v140
        %143 = vrot.lane.b32.xlu0 %v133, 80
        %v144 = vpop.permute.xlu0 %143
        %v146 = vmax.f32 %v142, %v144
        %147 = vrot.lane.b32.xlu0 %v133, 64
        %v148 = vpop.permute.xlu0 %147
        %v150 = vmax.f32 %v146, %v148
        %151 = vrot.lane.b32.xlu0 %v133, 48
        %v152 = vpop.permute.xlu0 %151
        %v154 = vmax.f32 %v150, %v152
        %155 = vrot.lane.b32.xlu0 %v133, 32
        %v156 = vpop.permute.xlu0 %155
        %v158 = vmax.f32 %v154, %v156
        %159 = vrot.lane.b32.xlu0 %v133, 16
        %v160 = vpop.permute.xlu0 %159
        %v162 = vmax.f32 %v158, %v160
        %v163 = vrot.slane %v133, 4
        %v165 = vmax.f32 %v162, %v163
        %v166 = vrot.slane %v136, 4
        %v168 = vmax.f32 %v165, %v166
        %v169 = vrot.slane %v140, 4
        %v171 = vmax.f32 %v168, %v169
        %v172 = vrot.slane %v144, 4
        %v174 = vmax.f32 %v171, %v172
        %v175 = vrot.slane %v148, 4
        %v177 = vmax.f32 %v174, %v175
        %v178 = vrot.slane %v152, 4
        %v180 = vmax.f32 %v177, %v178
        %v181 = vrot.slane %v156, 4
        %v183 = vmax.f32 %v180, %v181
        %v184 = vrot.slane %v160, 4
        %v186 = vmax.f32 %v183, %v184
        %vm187 = vcmask 125952
        %v188 = vsel %vm187, %v186, -inf
        %189 = vmax.xlane.f32.xlu0 %v188
        %v190 = vpop.xlane.xlu0 %189
        %vm191 = vcmask 60416
        %v192 = vsel %vm191, %v162, -inf
        %193 = vmax.xlane.f32.xlu0 %v192
        %v194 = vpop.xlane.xlu0 %193
        %vm195 = vcmask 126016
        %v196 = vsel %vm195, %v162, -inf
        %197 = vmax.xlane.f32.xlu0 %v196
        %v198 = vpop.xlane.xlu0 %197
        %v199 = vmax.f32 %v163, %v166
        %v200 = vmax.f32 %v199, %v169
        %v201 = vmax.f32 %v200, %v172
        %v202 = vmax.f32 %v201, %v175
        %v203 = vmax.f32 %v202, %v178
        %v204 = vmax.f32 %v203, %v181
        %v205 = vmax.f32 %v204, %v184
        %v206 = vsel %vm191, %v205, -inf
        %207 = vmax.xlane.f32.xlu0 %v206
        %v208 = vpop.xlane.xlu0 %207
        %v209 = vsel %vm195, %v205, -inf
        %210 = vmax.xlane.f32.xlu0 %v209
        %v211 = vpop.xlane.xlu0 %210
        %vm212 = vcmask 35840
        %v213 = vsel %vm212, %v150, -inf
        %214 = vmax.xlane.f32.xlu0 %v213
        %v215 = vpop.xlane.xlu0 %214
        %vm216 = vcmask 85032
        %v217 = vsel %vm216, %v150, -inf
        %218 = vmax.xlane.f32.xlu0 %v217
        %v219 = vpop.xlane.xlu0 %218
        %vm220 = vcmask 126040
        %v221 = vsel %vm220, %v150, -inf
        %222 = vmax.xlane.f32.xlu0 %v221
        %v223 = vpop.xlane.xlu0 %222
        %vm224 = vcmask 654336
        %v225 = vsel %vm224, %v144, %v172
        %v227 = vmax.f32 %v142, %v225
        %vm228 = vcmask 523264
        %v229 = vsel %vm228, %v148, %v175
        %v231 = vmax.f32 %v227, %v229
        %vm232 = vcmask 392192
        %v233 = vsel %vm232, %v152, %v178
        %v235 = vmax.f32 %v231, %v233
        %vm236 = vcmask 691840
        %v237 = vsel %vm236, %v235, -inf
        %238 = vmax.xlane.f32.xlu0 %v237
        %v239 = vpop.xlane.xlu0 %238
        %vm240 = vcmask 741032
        %v241 = vsel %vm240, %v235, -inf
        %242 = vmax.xlane.f32.xlu0 %v241
        %v243 = vpop.xlane.xlu0 %242
        %vm244 = vcmask 782040
        %v245 = vsel %vm244, %v235, -inf
        %246 = vmax.xlane.f32.xlu0 %v245
        %v247 = vpop.xlane.xlu0 %246
        %v248 = vmax.f32 %v172, %v175
        %v249 = vmax.f32 %v248, %v178
        %v250 = vmax.f32 %v249, %v181
        %v251 = vmax.f32 %v250, %v184
        %v252 = vsel %vm212, %v251, -inf
        %253 = vmax.xlane.f32.xlu0 %v252
        %v254 = vpop.xlane.xlu0 %253
        %v255 = vsel %vm216, %v251, -inf
        %256 = vmax.xlane.f32.xlu0 %v255
        %v257 = vpop.xlane.xlu0 %256
        %v258 = vsel %vm220, %v251, -inf
        %259 = vmax.xlane.f32.xlu0 %v258
        %v260 = vpop.xlane.xlu0 %259
        %vm261 = vcmask 27648
        %v262 = vsel %vm261, %v146, -inf
        %263 = vmax.xlane.f32.xlu0 %v262
        %v264 = vpop.xlane.xlu0 %263
        %vm265 = vcmask 60448
        %v266 = vsel %vm265, %v146, -inf
        %267 = vmax.xlane.f32.xlu0 %v266
        %v268 = vpop.xlane.xlu0 %267
        %vm269 = vcmask 93248
        %v270 = vsel %vm269, %v146, -inf
        %271 = vmax.xlane.f32.xlu0 %v270
        %v272 = vpop.xlane.xlu0 %271
        %vm273 = vcmask 126048
        %v274 = vsel %vm273, %v146, -inf
        %275 = vmax.xlane.f32.xlu0 %v274
        %v276 = vpop.xlane.xlu0 %275
        %vm277 = vcmask 552448
        %v278 = vsel %vm277, %v146, -inf
        %279 = vmax.xlane.f32.xlu0 %v278
        %v280 = vpop.xlane.xlu0 %279
        %vm281 = vcmask 585248
        %v282 = vsel %vm281, %v146, -inf
        %283 = vmax.xlane.f32.xlu0 %v282
        %v284 = vpop.xlane.xlu0 %283
        %vm285 = vcmask 618048
        %v286 = vsel %vm285, %v146, -inf
        %287 = vmax.xlane.f32.xlu0 %v286
        %v288 = vpop.xlane.xlu0 %287
        %vm289 = vcmask 650848
        %v290 = vsel %vm289, %v146, -inf
        %291 = vmax.xlane.f32.xlu0 %v290
        %v292 = vpop.xlane.xlu0 %291
        %v293 = vsel %vm261, %v201, -inf
        %294 = vmax.xlane.f32.xlu0 %v293
        %v295 = vpop.xlane.xlu0 %294
        %v296 = vsel %vm265, %v201, -inf
        %297 = vmax.xlane.f32.xlu0 %v296
        %v298 = vpop.xlane.xlu0 %297
        %v299 = vsel %vm269, %v201, -inf
        %300 = vmax.xlane.f32.xlu0 %v299
        %v301 = vpop.xlane.xlu0 %300
        %v302 = vsel %vm273, %v201, -inf
        %303 = vmax.xlane.f32.xlu0 %v302
        %v304 = vpop.xlane.xlu0 %303
        %v305 = vmax.f32 %v175, %v178
        %v306 = vmax.f32 %v305, %v181
        %v307 = vmax.f32 %v306, %v184
        %v308 = vsel %vm261, %v307, -inf
        %309 = vmax.xlane.f32.xlu0 %v308
        %v310 = vpop.xlane.xlu0 %309
        %v311 = vsel %vm265, %v307, -inf
        %312 = vmax.xlane.f32.xlu0 %v311
        %v313 = vpop.xlane.xlu0 %312
        %v314 = vsel %vm269, %v307, -inf
        %315 = vmax.xlane.f32.xlu0 %v314
        %v316 = vpop.xlane.xlu0 %315
        %v317 = vsel %vm273, %v307, -inf
        %318 = vmax.xlane.f32.xlu0 %v317
        %v319 = vpop.xlane.xlu0 %318
        %vm320 = vcmask 7168
        %v321 = vsel %vm320, %v190, %v194
        %vm322 = vcmask 15360
        %v323 = vsel %vm322, %v321, %v198
        %vm324 = vcmask 23552
        %v325 = vsel %vm324, %v323, %v208
        %vm326 = vcmask 31744
        %v327 = vsel %vm326, %v325, %v211
        %vm328 = vcmask 39936
        %v329 = vsel %vm328, %v327, %v215
        %vm330 = vcmask 48128
        %v331 = vsel %vm330, %v329, %v219
        %vm332 = vcmask 56320
        %v333 = vsel %vm332, %v331, %v223
        %vm334 = vcmask 64512
        %v335 = vsel %vm334, %v333, %v239
        %vm336 = vcmask 72704
        %v337 = vsel %vm336, %v335, %v243
        %vm338 = vcmask 80896
        %v339 = vsel %vm338, %v337, %v247
        %vm340 = vcmask 89088
        %v341 = vsel %vm340, %v339, %v254
        %vm342 = vcmask 97280
        %v343 = vsel %vm342, %v341, %v257
        %vm344 = vcmask 105472
        %v345 = vsel %vm344, %v343, %v260
        %vm346 = vcmask 113664
        %v347 = vsel %vm346, %v345, %v264
        %vm348 = vcmask 121856
        %v349 = vsel %vm348, %v347, %v268
        %v350 = vsel %vm320, %v272, %v276
        %v351 = vsel %vm322, %v350, %v280
        %v352 = vsel %vm324, %v351, %v284
        %v353 = vsel %vm326, %v352, %v288
        %v354 = vsel %vm328, %v353, %v292
        %v355 = vsel %vm330, %v354, %v295
        %v356 = vsel %vm332, %v355, %v298
        %v357 = vsel %vm334, %v356, %v301
        %v358 = vsel %vm336, %v357, %v304
        %v359 = vsel %vm338, %v358, %v310
        %v360 = vsel %vm340, %v359, %v313
        %v361 = vsel %vm342, %v360, %v316
        %v362 = vsel %vm344, %v361, %v319
        %v363 = vsel %vm346, %v362, 0.0
        %365 = vrot.lane.b32.xlu0 %v363, 16
        %v366 = vpop.permute.xlu0 %365
        %vm368 = vcmask 130048
        %v369 = vsel %vm368, %v349, %v366
        %370 = vst [vmem:[%s132] sm:$0xf] %v369
        %s371 = sand.u32 %s52, 1
        %s372 = scalar_lea.sflag [#allocation4], %s371
        %s373 = sand.u32 %s52, 1
        %s374 = smul.addr %s373, 4
        %s375 = scalar_lea.vmem [#allocation5], %s374
        // Predicated region
        $region29: #{tpu_custom_call.1} parent=23 // pred_check
          %p376 = pneg %p62
        $region30: #{tpu_custom_call.1} parent=23 // pred_check_branch
          %378 = sbr.rel (%p376) target = $region32
        $region31: #{tpu_custom_call.1} parent=23 // pred_region
          %s380 = ssub.s32 64, 64
          %381 = vsyncadd %s372, %s380
          %s382 = smul.addr %s18, 64
          %s383 = scalar_lea.hbm %s1, %s382
          %s385 = sshll.u32 %s375, 4
          %s386 = int_to_ptr.vmem [resolvable:$true] %s385
          %388 = dma.vmem_to_hbm [thread:$0]  %s386, 64, %s383, %s372
        $region32: #{tpu_custom_call.1} parent=23 // pred_fallthru
          _
      $region24: #{tpu_custom_call.1} parent=5 // pred_fallthru
        _
      %p389 = scmp.le.s32.totalorder 2, %s13
      // Predicated region
      $region33: #{tpu_custom_call.1} parent=5 // pred_check
        %p390 = pneg %p389
      $region34: #{tpu_custom_call.1} parent=5 // pred_check_branch
        %392 = sbr.rel (%p390) target = $region36
      $region35: #{tpu_custom_call.1} parent=5 // pred_region
        %s393 = ssub.s32 %s13, 2
        // Predicated region
        $region37: #{tpu_custom_call.1} parent=35 // pred_check
          %p394 = pneg %p68
        $region38: #{tpu_custom_call.1} parent=35 // pred_check_branch
          %396 = sbr.rel (%p394) target = $region40
        $region39: #{tpu_custom_call.1} parent=35 // pred_region
          %s397 = sand.u32 %s53, 1
          %s398 = scalar_lea.sflag [#allocation4], %s397
          %s399 = sand.u32 %s53, 1
          %s400 = smul.addr %s399, 4
          %s401 = scalar_lea.vmem [#allocation5], %s400
          %402 = dma.done %s398, 64
        $region40: #{tpu_custom_call.1} parent=35 // pred_fallthru
          _
      $region36: #{tpu_custom_call.1} parent=5 // pred_fallthru
        _
    $region6: #{tpu_custom_call.1} parent=1 // loop_footer
      %s17 = sadd.s32 1, %s13
    $region7: #{tpu_custom_call.1} parent=1 // loop_footer_branch
      %12 = sbr.rel target = $region3
    $region8: #{tpu_custom_call.1} parent=1 // loop_exit
      _
    %403 = vsyncpa [#allocation3], 1
    %s404 = scalar_lea.sflag [#allocation3], 1
    %405 = vsyncpa %s404, 1
    %406 = vsyncpa [#allocation4], 1
    %s407 = scalar_lea.sflag [#allocation4], 1
    %408 = vsyncpa %s407, 1

</llo_original>
